<compile_context>
chip_gen: v6e
topology: v6e:2x2x1
jax: 0.10.0
libtpu: 0.0.40
codegen_flags: <defaults>
</compile_context>

<pallas_src>
import functools
import math

import jax
import jax.numpy as jnp
from jax import lax
from jax.experimental import pallas as pl
from jax.experimental.pallas import tpu as pltpu


# ---------------------------------------------------------------------------
# ColorPatchLoss ('l1' / 'ssd') — per-point patch error kernel
# ---------------------------------------------------------------------------
def _patch_error_kernel(pred_ref, gt_ref, sel_ref, mask_ref, err_ref, *,
                        loss_type, inv_c):
    # Tiles arrive in their native dtype over DMA; cast to f32 here.
    diff = pred_ref[...].astype(jnp.float32) - gt_ref[...].astype(jnp.float32)
    if loss_type == "l1":
        per_elem = jnp.abs(diff)
    elif loss_type == "ssd":
        per_elem = diff * diff
    else:
        raise ValueError(f"unsupported loss_type {loss_type!r}")
    # Per-point sums on the (otherwise idle) MXU:
    #   (block_rows, W) @ (W, g) -> (block_rows, g), W = g * Npx * C.
    sums = jnp.dot(per_elem, sel_ref[...],
                   preferred_element_type=jnp.float32,
                   precision=lax.Precision.HIGHEST)
    # mean over channels == sum * 1/C, then apply the per-point mask.
    err_ref[...] = sums * inv_c * mask_ref[...]


def patch_error(pred, gt, mask, loss_type="l1", *,
                block_rows_target=1024,
                input_vmem_budget_bytes=8 * 1024 * 1024,
                max_packed_width=8192):
    """Per-point masked patch error. pred/gt: [N, Npx, C], mask: [N, 1] -> [N] f32."""
    n, npx, c = pred.shape
    d = npx * c

    # Pack g points per row so the lane dim W = g*d is a multiple of 128.
    w = (d * 128) // math.gcd(d, 128)          # lcm(d, 128)
    if w > max_packed_width:
        w, g = d, 1                            # unpacked fallback for huge patches
    else:
        g = w // d

    # Keep pred/gt in their native dtype for the HBM->VMEM DMA (no wrapper upcast).
    p2 = pred.reshape(n, d)
    g2 = gt.reshape(n, d)
    m1 = mask.reshape(n).astype(jnp.float32)

    # Pad at most g-1 rows for packing (zero-copy reshape view when g | N).
    n_pack = -(-n // g) * g
    if n_pack != n:
        pad = n_pack - n
        p2 = jnp.pad(p2, ((0, pad), (0, 0)))
        g2 = jnp.pad(g2, ((0, pad), (0, 0)))
        m1 = jnp.pad(m1, (0, pad))
    nb = n_pack // g

    p_packed = p2.reshape(nb, w)               # row-major -> free view
    g_packed = g2.reshape(nb, w)
    m_packed = m1.reshape(nb, g)

    # Block rows from the VMEM budget: 2 inputs x 2 pipeline buffers per step.
    # Budget of 8 MiB is safe on v5e (16 MiB default scoped VMEM), v6e (32 MiB)
    # and v7x (64 MiB physical); vmem_limit_bytes below adds headroom.
    itemsize = jnp.dtype(pred.dtype).itemsize
    cap = max(8, (input_vmem_budget_bytes // (2 * 2 * w * itemsize)) // 8 * 8)
    block_rows = min(block_rows_target, cap)
    if nb <= block_rows:
        block_rows = nb                        # single full-extent block
    else:
        block_rows = max(8, (block_rows // 8) * 8)
    grid = (-(-nb // block_rows),)

    # Block-diagonal selector: packed column j belongs to point slot j // d.
    sel = (jnp.arange(w)[:, None] // d == jnp.arange(g)[None, :]).astype(jnp.float32)

    kernel = functools.partial(_patch_error_kernel, loss_type=loss_type, inv_c=1.0 / c)
    err = pl.pallas_call(
        kernel,
        out_shape=jax.ShapeDtypeStruct((nb, g), jnp.float32),
        grid=grid,
        in_specs=[
            pl.BlockSpec((block_rows, w), lambda i: (i, 0)),
            pl.BlockSpec((block_rows, w), lambda i: (i, 0)),
            pl.BlockSpec((w, g), lambda i: (0, 0)),
            pl.BlockSpec((block_rows, g), lambda i: (i, 0)),
        ],
        out_specs=pl.BlockSpec((block_rows, g), lambda i: (i, 0)),
        compiler_params=pltpu.CompilerParams(
            dimension_semantics=("parallel",),   # lets v7x's 2 TCs split the grid
            vmem_limit_bytes=32 * 1024 * 1024,
        ),
    )(p_packed, g_packed, sel, m_packed)

    return err.reshape(n_pack)[:n]


def color_patch_loss(pred, gt, mask, penalize_ratio=0.3, loss_type="l1", **kw):
    """Mirror of ColorPatchLoss.forward for type in {'l1', 'ssd'}."""
    n = pred.shape[0]
    error = patch_error(pred, gt, mask, loss_type=loss_type, **kw)      # [N]
    mask_f = mask.reshape(n).astype(jnp.float32)

    # error, indices = torch.sort(error, descending=True)
    order = jnp.argsort(-error)
    error_sorted = error[order]
    mask_sorted = mask_f[order]

    # mask[: int(penalize_ratio * mask.sum())] = False
    k = jnp.floor(penalize_ratio * jnp.sum(mask_f)).astype(jnp.int32)
    keep = mask_sorted * (jnp.arange(n) >= k).astype(jnp.float32)

    # error[mask.squeeze()].mean()   (NaN if nothing kept — same as PyTorch)
    return jnp.sum(error_sorted * keep) / jnp.sum(keep)


# ---------------------------------------------------------------------------
# ColorPixelLoss — sum(|pred-gt|) reduction kernel
# ---------------------------------------------------------------------------
def _pixel_sum_abs_kernel(pred_ref, gt_ref, out_ref, *, n_valid, block_n):
    i = pl.program_id(0)
    diff = pred_ref[...].astype(jnp.float32) - gt_ref[...].astype(jnp.float32)
    a = jnp.abs(diff)
    # Guard the ragged tail block (reads past N are undefined).
    row = lax.broadcasted_iota(jnp.int32, a.shape, 0) + i * block_n
    a = jnp.where(row < n_valid, a, 0.0)

    @pl.when(i == 0)
    def _():
        out_ref[...] = jnp.zeros_like(out_ref)

    out_ref[...] += jnp.sum(a, keepdims=True)


def pixel_loss(pred, gt, mask, *, block_n_target=2048):
    """Mirror of ColorPixelLoss.forward (l1)."""
    n, c = pred.shape
    if n <= block_n_target:
        block_n = n
    else:
        block_n = max(8, (block_n_target // 8) * 8)
    grid = (-(-n // block_n),)
    kernel = functools.partial(_pixel_sum_abs_kernel, n_valid=n, block_n=block_n)
    total = pl.pallas_call(
        kernel,
        out_shape=jax.ShapeDtypeStruct((1, 1), jnp.float32),
        grid=grid,
        in_specs=[pl.BlockSpec((block_n, c), lambda i: (i, 0)),
                  pl.BlockSpec((block_n, c), lambda i: (i, 0))],
        out_specs=pl.BlockSpec((1, 1), lambda i: (0, 0)),
        compiler_params=pltpu.CompilerParams(dimension_semantics=("arbitrary",)),
    )(pred, gt)[0, 0]
    if mask is not None:
        return total / (jnp.sum(mask.astype(jnp.float32)) + 1e-4)
    return total / (n * c)


# ---------------------------------------------------------------------------
# ColorLoss.forward
# ---------------------------------------------------------------------------
def color_loss_forward(color_base, color, gt_color, color_pixel, pixel_mask,
                       patch_colors, gt_patch_colors, patch_mask, *,
                       color_base_weight, color_weight, color_pixel_weight,
                       color_patch_weight, penalize_ratio=0.3,
                       patch_loss_type="l1"):
    """Mirror of ColorLoss.forward (pixel_loss_type='l1', patch type 'l1'/'ssd')."""
    color_base_loss = 0.0
    color_loss = 0.0
    color_pixel_loss_ = 0.0
    color_patch_loss_ = 0.0
    if color_base is not None:
        color_base_loss = pixel_loss(color_base, gt_color, pixel_mask)
    if color is not None:
        color_loss = pixel_loss(color, gt_color, pixel_mask)
    if color_pixel is not None:
        color_pixel_loss_ = pixel_loss(color_pixel, gt_color, pixel_mask)
    if patch_colors is not None:
        color_patch_loss_ = color_patch_loss(
            patch_colors, gt_patch_colors, patch_mask,
            penalize_ratio=penalize_ratio, loss_type=patch_loss_type)
    total_loss = ((color_base_loss * color_base_weight
                   + color_loss * color_weight
                   + color_pixel_loss_ * color_pixel_weight)
                  / (color_base_weight + color_weight + color_pixel_weight)
                  + color_patch_loss_ * color_patch_weight)
    return {"loss": total_loss,
            "color_base_loss": color_base_loss,
            "color_loss": color_loss,
            "color_pixel_loss": color_pixel_loss_,
            "color_patch_loss": color_patch_loss_}


# ---------------------------------------------------------------------------
# pure-jnp references (silent correctness check)
# ---------------------------------------------------------------------------
def _ref_pixel_loss(pred, gt, mask):
    err = jnp.sum(jnp.abs(pred.astype(jnp.float32) - gt.astype(jnp.float32)))
    if mask is not None:
        return err / (jnp.sum(mask.astype(jnp.float32)) + 1e-4)
    return err / pred.size


def _ref_patch_error(pred, gt, mask, loss_type):
    diff = pred.astype(jnp.float32) - gt.astype(jnp.float32)
    per = jnp.abs(diff) if loss_type == "l1" else diff * diff
    return per.mean(axis=-1).sum(axis=-1) * mask[:, 0].astype(jnp.float32)


def _ref_patch_loss(pred, gt, mask, penalize_ratio, loss_type):
    error = _ref_patch_error(pred, gt, mask, loss_type)
    n = error.shape[0]
    order = jnp.argsort(-error)
    es = error[order]
    ms = mask[:, 0].astype(jnp.float32)[order]
    k = jnp.floor(penalize_ratio * jnp.sum(ms)).astype(jnp.int32)
    keep = ms * (jnp.arange(n) >= k).astype(jnp.float32)
    return jnp.sum(es * keep) / jnp.sum(keep)


def _ref_color_loss_forward(color_base, color, gt_color, color_pixel, pixel_mask,
                            patch_colors, gt_patch_colors, patch_mask, *,
                            color_base_weight, color_weight, color_pixel_weight,
                            color_patch_weight, penalize_ratio, patch_loss_type):
    cb = _ref_pixel_loss(color_base, gt_color, pixel_mask)
    cl = _ref_pixel_loss(color, gt_color, pixel_mask)
    cp = _ref_pixel_loss(color_pixel, gt_color, pixel_mask)
    cpatch = _ref_patch_loss(patch_colors, gt_patch_colors, patch_mask,
                             penalize_ratio, patch_loss_type)
    total = ((cb * color_base_weight + cl * color_weight + cp * color_pixel_weight)
             / (color_base_weight + color_weight + color_pixel_weight)
             + cpatch * color_patch_weight)
    return {"loss": total, "color_base_loss": cb, "color_loss": cl,
            "color_pixel_loss": cp, "color_patch_loss": cpatch}


if __name__ == "__main__":
    key = jax.random.PRNGKey(0)
    ks = jax.random.split(key, 8)

    # pixel-level inputs: [N_pix, 3]
    n_pix = 300
    color_base = jax.random.normal(ks[0], (n_pix, 3), dtype=jnp.float32)
    color = jax.random.normal(ks[1], (n_pix, 3), dtype=jnp.float32)
    color_px = jax.random.normal(ks[2], (n_pix, 3), dtype=jnp.float32)
    gt_color = jax.random.normal(ks[3], (n_pix, 3), dtype=jnp.float32)
    pixel_mask = jax.random.uniform(ks[4], (n_pix, 1)) < 0.7

    # patch-level inputs: [N_pts, Npx, 3]
    n_pts, npx = 500, 16
    patch_colors = jax.random.normal(ks[5], (n_pts, npx, 3), dtype=jnp.float32)
    gt_patch_colors = jax.random.normal(ks[6], (n_pts, npx, 3), dtype=jnp.float32)
    patch_mask = jax.random.uniform(ks[7], (n_pts, 1)) < 0.7

    weights = dict(color_base_weight=1.0, color_weight=0.5,
                   color_pixel_weight=0.5, color_patch_weight=0.1)

    losses = color_loss_forward(color_base, color, gt_color, color_px, pixel_mask,
                                patch_colors, gt_patch_colors, patch_mask,
                                penalize_ratio=0.3, patch_loss_type="l1", **weights)
    losses = jax.block_until_ready(losses)

    ref = _ref_color_loss_forward(color_base, color, gt_color, color_px, pixel_mask,
                                  patch_colors, gt_patch_colors, patch_mask,
                                  penalize_ratio=0.3, patch_loss_type="l1", **weights)
    for name in ("loss", "color_base_loss", "color_loss",
                 "color_pixel_loss", "color_patch_loss"):
        a, b = jnp.asarray(losses[name]), jnp.asarray(ref[name])
        assert jnp.allclose(a, b, rtol=1e-4, atol=1e-5), (name, a, b)

    # extra checks on the Pallas pieces themselves
    err_ref = _ref_patch_error(patch_colors, gt_patch_colors, patch_mask, "l1")
    for bt in (1024, 16):            # default single block and multi-step ragged grid
        err_k = patch_error(patch_colors, gt_patch_colors, patch_mask, "l1",
                            block_rows_target=bt)
        assert jnp.allclose(err_k, err_ref, rtol=2e-5, atol=1e-5), bt

    err_ref_ssd = _ref_patch_error(patch_colors, gt_patch_colors, patch_mask, "ssd")
    err_k_ssd = patch_error(patch_colors, gt_patch_colors, patch_mask, "ssd")
    assert jnp.allclose(err_k_ssd, err_ref_ssd, rtol=2e-5, atol=1e-5)

    # native-dtype (bf16) streaming path: DMA bf16, cast to f32 in-kernel
    pc_bf = patch_colors.astype(jnp.bfloat16)
    gt_bf = gt_patch_colors.astype(jnp.bfloat16)
    err_bf = patch_error(pc_bf, gt_bf, patch_mask, "l1")
    err_bf_ref = _ref_patch_error(pc_bf, gt_bf, patch_mask, "l1")
    assert jnp.allclose(err_bf, err_bf_ref, rtol=2e-5, atol=1e-5)

    # multi-block pixel reduction path
    px_k = pixel_loss(color_base, gt_color, pixel_mask, block_n_target=64)
    px_ref = _ref_pixel_loss(color_base, gt_color, pixel_mask)
    assert jnp.allclose(px_k, px_ref, rtol=1e-5, atol=1e-6)

    jax.block_until_ready((err_k, err_k_ssd, err_bf, px_k))
    print("KERNEL_OK")
</pallas_src>

<mosaic_0001>
module attributes {stable_mosaic.version = 11 : i64} {
  func.func @_pixel_sum_abs_kernel(%arg0: i32, %arg1: memref<300x3xf32, #tpu.memory_space<vmem>>, %arg2: memref<300x3xf32, #tpu.memory_space<vmem>>, %arg3: memref<1x1xf32, #tpu.memory_space<vmem>>) attributes {dimension_semantics = [#tpu.dimension_semantics<arbitrary>], iteration_bounds = array<i64: 1>, scalar_prefetch = 0 : i64, scratch_operands = 0 : i64, tpu.core_type = #tpu.core_type<tc>, window_params = [{transform_indices = @transform_0, window_bounds = array<i64: 300, 3>}, {transform_indices = @transform_1, window_bounds = array<i64: 300, 3>}, {pipeline_mode = #tpu.pipeline_mode<synchronous>, transform_indices = @transform_2, window_bounds = array<i64: 1, 1>}]} {
    %c0 = arith.constant 0 : index
    %c0_0 = arith.constant 0 : index
    %0 = vector.load %arg1[%c0, %c0_0] : memref<300x3xf32, #tpu.memory_space<vmem>>, vector<300x3xf32>
    %c0_1 = arith.constant 0 : index
    %c0_2 = arith.constant 0 : index
    %1 = vector.load %arg2[%c0_1, %c0_2] : memref<300x3xf32, #tpu.memory_space<vmem>>, vector<300x3xf32>
    %2 = arith.subf %0, %1 : vector<300x3xf32>
    %3 = math.absf %2 : vector<300x3xf32>
    %4 = tpu.iota {dimensions = array<i32: 0>} : vector<300x3xi32>
    %c300_i32 = arith.constant 300 : i32
    %5 = arith.muli %arg0, %c300_i32 : i32
    %6 = vector.broadcast %5 : i32 to vector<300x3xi32>
    %7 = arith.addi %4, %6 : vector<300x3xi32>
    %c300_i32_3 = arith.constant 300 : i32
    %8 = vector.broadcast %c300_i32_3 : i32 to vector<300x3xi32>
    %9 = arith.cmpi slt, %7, %8 : vector<300x3xi32>
    %cst = arith.constant 0.000000e+00 : f32
    %10 = vector.broadcast %cst : f32 to vector<300x3xf32>
    %11 = arith.select %9, %3, %10 : vector<300x3xi1>, vector<300x3xf32>
    %c0_i32 = arith.constant 0 : i32
    %12 = arith.cmpi eq, %arg0, %c0_i32 : i32
    %13 = arith.extui %12 : i1 to i32
    %c0_i32_4 = arith.constant 0 : i32
    %14 = arith.cmpi ne, %13, %c0_i32_4 : i32
    scf.if %14 {
      %cst_10 = arith.constant 0.000000e+00 : f32
      %23 = vector.broadcast %cst_10 : f32 to vector<1x1xf32>
      %c0_11 = arith.constant 0 : index
      %c0_12 = arith.constant 0 : index
      %24 = vector.load %arg3[%c0_11, %c0_12] : memref<1x1xf32, #tpu.memory_space<vmem>>, vector<1x1xf32>
      tpu.vector_store %arg3[%c0_11, %c0_12], %23 {strides = array<i32>} : memref<1x1xf32, #tpu.memory_space<vmem>>, vector<1x1xf32>,
    } else {
    }
    %c0_5 = arith.constant 0 : index
    %c0_6 = arith.constant 0 : index
    %15 = vector.load %arg3[%c0_5, %c0_6] : memref<1x1xf32, #tpu.memory_space<vmem>>, vector<1x1xf32>
    %16 = vector.shape_cast %11 : vector<300x3xf32> to vector<1x300x3xf32>
    %cst_7 = arith.constant dense<0.000000e+00> : vector<1xf32>
    %17 = vector.multi_reduction <add>, %16, %cst_7 [1, 2] : vector<1x300x3xf32> to vector<1xf32>
    %18 = vector.shape_cast %17 : vector<1xf32> to vector<1x1x1xf32>
    %19 = vector.extract %18[0, 0, 0] : f32 from vector<1x1x1xf32>
    %20 = vector.broadcast %19 : f32 to vector<1x1xf32>
    %21 = arith.addf %15, %20 : vector<1x1xf32>
    %c0_8 = arith.constant 0 : index
    %c0_9 = arith.constant 0 : index
    %22 = vector.load %arg3[%c0_8, %c0_9] : memref<1x1xf32, #tpu.memory_space<vmem>>, vector<1x1xf32>
    tpu.vector_store %arg3[%c0_8, %c0_9], %21 {strides = array<i32>} : memref<1x1xf32, #tpu.memory_space<vmem>>, vector<1x1xf32>,
    return
  }
  func.func @transform_0(%arg0: i32) -> (i32, i32) {
    %c0_i32 = arith.constant 0 : i32
    %c0_i32_0 = arith.constant 0 : i32
    return %arg0, %c0_i32 : i32, i32
  }
  func.func @transform_1(%arg0: i32) -> (i32, i32) {
    %c0_i32 = arith.constant 0 : i32
    %c0_i32_0 = arith.constant 0 : i32
    return %arg0, %c0_i32 : i32, i32
  }
  func.func @transform_2(%arg0: i32) -> (i32, i32) {
    %c0_i32 = arith.constant 0 : i32
    %c0_i32_0 = arith.constant 0 : i32
    %c0_i32_1 = arith.constant 0 : i32
    return %c0_i32, %c0_i32_0 : i32, i32
  }
}

</mosaic_0001>

<llo_original>
// kernel: tpu_custom_call.1
$region0: #{tpu_custom_call.1}
  #allocation0 [shape = 'u32[]', space=smem, size = 0x4, offset = 0x4, fixed_abs, tag = 'smem constant byte address 0x4 - core index']
  #allocation1 [shape = 'u32[144,128]{1,0:T(1,128)}', space=vmem, size = 0x12000, scoped, tag = 'internal scratch']
  %s0 = inlined_call_operand.vmem [shape: f32[300,3], index: 0, kind: input, shape index: {}]
  %s1 = inlined_call_operand.vmem [shape: f32[300,3], index: 1, kind: input, shape index: {}]
  %s2 = inlined_call_operand.hbm [shape: f32[1,1], index: 2, kind: output, shape index: {}]
  %s3 = sld [smem:[#allocation0]]
  $region22: #{tpu_custom_call.1} parent=0
    _
  %s5 = ssub.s32 1, %s3
  %s6 = scalar_select 0, %s5, %s3
  $region1: #{tpu_custom_call.1} parent=0
    #allocation2 [shape = 'u8[512]{0}', space=vmem, size = 0x400, scoped, tag = 'output window, operand 0, single buffered']
    #allocation3 [shape = 's32[1]{0}', space=sflag, size = 0x4, scoped, tag = 'scoped memory for tpu_custom_call.1']
    %7 = vsyncpa [#allocation3], 0
    // Predicated region
    $region2: #{tpu_custom_call.1} parent=1 // pred_check
      _
    $region3: #{tpu_custom_call.1} parent=1 // pred_check_branch
      %9 = sbr.rel (0) target = $region5
    $region4: #{tpu_custom_call.1} parent=1 // pred_region
      _
    $region5: #{tpu_custom_call.1} parent=1 // pred_fallthru
      _
    // Predicated region
    $region6: #{tpu_custom_call.1} parent=1 // pred_check
      _
    $region7: #{tpu_custom_call.1} parent=1 // pred_check_branch
      %11 = sbr.rel (0) target = $region9
    $region8: #{tpu_custom_call.1} parent=1 // pred_region
      _
    $region9: #{tpu_custom_call.1} parent=1 // pred_fallthru
      _
    %v12 = vld [vmem:[%s0] sm:$0xff]
    %v13 = vld [vmem:[%s0 + $0x8] sm:$0xff]
    %v14 = vld [vmem:[%s0 + $0x10] sm:$0xff]
    %v15 = vld [vmem:[%s0 + $0x18] sm:$0xff]
    %v16 = vld [vmem:[%s0 + $0x20] sm:$0xff]
    %v17 = vld [vmem:[%s0 + $0x28] sm:$0xff]
    %v18 = vld [vmem:[%s0 + $0x30] sm:$0xff]
    %v19 = vld [vmem:[%s0 + $0x38] sm:$0xff]
    %v20 = vld [vmem:[%s0 + $0x40] sm:$0xff]
    %v21 = vld [vmem:[%s0 + $0x48] sm:$0xff]
    %v22 = vld [vmem:[%s0 + $0x50] sm:$0xff]
    %v23 = vld [vmem:[%s0 + $0x58] sm:$0xff]
    %v24 = vld [vmem:[%s0 + $0x60] sm:$0xff]
    %v25 = vld [vmem:[%s0 + $0x68] sm:$0xff]
    %v26 = vld [vmem:[%s0 + $0x70] sm:$0xff]
    %v27 = vld [vmem:[%s0 + $0x78] sm:$0xff]
    %v28 = vld [vmem:[%s0 + $0x80] sm:$0xff]
    %v29 = vld [vmem:[%s0 + $0x88] sm:$0xff]
    %v30 = vld [vmem:[%s0 + $0x90] sm:$0xff]
    %v31 = vld [vmem:[%s0 + $0x98] sm:$0xff]
    %v32 = vld [vmem:[%s0 + $0xa0] sm:$0xff]
    %v33 = vld [vmem:[%s0 + $0xa8] sm:$0xff]
    %v34 = vld [vmem:[%s0 + $0xb0] sm:$0xff]
    %v35 = vld [vmem:[%s0 + $0xb8] sm:$0xff]
    %v36 = vld [vmem:[%s0 + $0xc0] sm:$0xff]
    %v37 = vld [vmem:[%s0 + $0xc8] sm:$0xff]
    %v38 = vld [vmem:[%s0 + $0xd0] sm:$0xff]
    %v39 = vld [vmem:[%s0 + $0xd8] sm:$0xff]
    %v40 = vld [vmem:[%s0 + $0xe0] sm:$0xff]
    %v41 = vld [vmem:[%s0 + $0xe8] sm:$0xff]
    %v42 = vld [vmem:[%s0 + $0xf0] sm:$0xff]
    %v43 = vld [vmem:[%s0 + $0xf8] sm:$0xff]
    %v44 = vld [vmem:[%s0 + $0x100] sm:$0xff]
    %v45 = vld [vmem:[%s0 + $0x108] sm:$0xff]
    %v46 = vld [vmem:[%s0 + $0x110] sm:$0xff]
    %v47 = vld [vmem:[%s0 + $0x118] sm:$0xff]
    %v48 = vld [vmem:[%s0 + $0x120] sm:$0xff]
    %v49 = vld [vmem:[%s0 + $0x128] sm:$0xf]
    %v50 = vld [vmem:[%s1] sm:$0xff]
    %v51 = vld [vmem:[%s1 + $0x8] sm:$0xff]
    %v52 = vld [vmem:[%s1 + $0x10] sm:$0xff]
    %v53 = vld [vmem:[%s1 + $0x18] sm:$0xff]
    %v54 = vld [vmem:[%s1 + $0x20] sm:$0xff]
    %v55 = vld [vmem:[%s1 + $0x28] sm:$0xff]
    %v56 = vld [vmem:[%s1 + $0x30] sm:$0xff]
    %v57 = vld [vmem:[%s1 + $0x38] sm:$0xff]
    %v58 = vld [vmem:[%s1 + $0x40] sm:$0xff]
    %v59 = vld [vmem:[%s1 + $0x48] sm:$0xff]
    %v60 = vld [vmem:[%s1 + $0x50] sm:$0xff]
    %v61 = vld [vmem:[%s1 + $0x58] sm:$0xff]
    %v62 = vld [vmem:[%s1 + $0x60] sm:$0xff]
    %v63 = vld [vmem:[%s1 + $0x68] sm:$0xff]
    %v64 = vld [vmem:[%s1 + $0x70] sm:$0xff]
    %v65 = vld [vmem:[%s1 + $0x78] sm:$0xff]
    %v66 = vld [vmem:[%s1 + $0x80] sm:$0xff]
    %v67 = vld [vmem:[%s1 + $0x88] sm:$0xff]
    %v68 = vld [vmem:[%s1 + $0x90] sm:$0xff]
    %v69 = vld [vmem:[%s1 + $0x98] sm:$0xff]
    %v70 = vld [vmem:[%s1 + $0xa0] sm:$0xff]
    %v71 = vld [vmem:[%s1 + $0xa8] sm:$0xff]
    %v72 = vld [vmem:[%s1 + $0xb0] sm:$0xff]
    %v73 = vld [vmem:[%s1 + $0xb8] sm:$0xff]
    %v74 = vld [vmem:[%s1 + $0xc0] sm:$0xff]
    %v75 = vld [vmem:[%s1 + $0xc8] sm:$0xff]
    %v76 = vld [vmem:[%s1 + $0xd0] sm:$0xff]
    %v77 = vld [vmem:[%s1 + $0xd8] sm:$0xff]
    %v78 = vld [vmem:[%s1 + $0xe0] sm:$0xff]
    %v79 = vld [vmem:[%s1 + $0xe8] sm:$0xff]
    %v80 = vld [vmem:[%s1 + $0xf0] sm:$0xff]
    %v81 = vld [vmem:[%s1 + $0xf8] sm:$0xff]
    %v82 = vld [vmem:[%s1 + $0x100] sm:$0xff]
    %v83 = vld [vmem:[%s1 + $0x108] sm:$0xff]
    %v84 = vld [vmem:[%s1 + $0x110] sm:$0xff]
    %v85 = vld [vmem:[%s1 + $0x118] sm:$0xff]
    %v86 = vld [vmem:[%s1 + $0x120] sm:$0xff]
    %v87 = vld [vmem:[%s1 + $0x128] sm:$0xf]
    %v88 = vsub.f32 %v12, %v50
    %v89 = vsub.f32 %v13, %v51
    %v90 = vsub.f32 %v14, %v52
    %v91 = vsub.f32 %v15, %v53
    %v92 = vsub.f32 %v16, %v54
    %v93 = vsub.f32 %v17, %v55
    %v94 = vsub.f32 %v18, %v56
    %v95 = vsub.f32 %v19, %v57
    %v96 = vsub.f32 %v20, %v58
    %v97 = vsub.f32 %v21, %v59
    %v98 = vsub.f32 %v22, %v60
    %v99 = vsub.f32 %v23, %v61
    %v100 = vsub.f32 %v24, %v62
    %v101 = vsub.f32 %v25, %v63
    %v102 = vsub.f32 %v26, %v64
    %v103 = vsub.f32 %v27, %v65
    %v104 = vsub.f32 %v28, %v66
    %v105 = vsub.f32 %v29, %v67
    %v106 = vsub.f32 %v30, %v68
    %v107 = vsub.f32 %v31, %v69
    %v108 = vsub.f32 %v32, %v70
    %v109 = vsub.f32 %v33, %v71
    %v110 = vsub.f32 %v34, %v72
    %v111 = vsub.f32 %v35, %v73
    %v112 = vsub.f32 %v36, %v74
    %v113 = vsub.f32 %v37, %v75
    %v114 = vsub.f32 %v38, %v76
    %v115 = vsub.f32 %v39, %v77
    %v116 = vsub.f32 %v40, %v78
    %v117 = vsub.f32 %v41, %v79
    %v118 = vsub.f32 %v42, %v80
    %v119 = vsub.f32 %v43, %v81
    %v120 = vsub.f32 %v44, %v82
    %v121 = vsub.f32 %v45, %v83
    %v122 = vsub.f32 %v46, %v84
    %v123 = vsub.f32 %v47, %v85
    %v124 = vsub.f32 %v48, %v86
    %v125 = vsub.f32 %v49, %v87
    %v126 = vand.u32 2147483647, %v88
    %v127 = vand.u32 2147483647, %v89
    %v128 = vand.u32 2147483647, %v90
    %v129 = vand.u32 2147483647, %v91
    %v130 = vand.u32 2147483647, %v92
    %v131 = vand.u32 2147483647, %v93
    %v132 = vand.u32 2147483647, %v94
    %v133 = vand.u32 2147483647, %v95
    %v134 = vand.u32 2147483647, %v96
    %v135 = vand.u32 2147483647, %v97
    %v136 = vand.u32 2147483647, %v98
    %v137 = vand.u32 2147483647, %v99
    %v138 = vand.u32 2147483647, %v100
    %v139 = vand.u32 2147483647, %v101
    %v140 = vand.u32 2147483647, %v102
    %v141 = vand.u32 2147483647, %v103
    %v142 = vand.u32 2147483647, %v104
    %v143 = vand.u32 2147483647, %v105
    %v144 = vand.u32 2147483647, %v106
    %v145 = vand.u32 2147483647, %v107
    %v146 = vand.u32 2147483647, %v108
    %v147 = vand.u32 2147483647, %v109
    %v148 = vand.u32 2147483647, %v110
    %v149 = vand.u32 2147483647, %v111
    %v150 = vand.u32 2147483647, %v112
    %v151 = vand.u32 2147483647, %v113
    %v152 = vand.u32 2147483647, %v114
    %v153 = vand.u32 2147483647, %v115
    %v154 = vand.u32 2147483647, %v116
    %v155 = vand.u32 2147483647, %v117
    %v156 = vand.u32 2147483647, %v118
    %v157 = vand.u32 2147483647, %v119
    %v158 = vand.u32 2147483647, %v120
    %v159 = vand.u32 2147483647, %v121
    %v160 = vand.u32 2147483647, %v122
    %v161 = vand.u32 2147483647, %v123
    %v162 = vand.u32 2147483647, %v124
    %v163 = vand.u32 2147483647, %v125
    %v164 = vlaneseq
    %v165 = vshrl.u32 %v164, 7
    %v166 = vadd.s32 %v165, 8
    %v167 = vadd.s32 %v165, 16
    %v168 = vadd.s32 %v165, 24
    %v169 = vadd.s32 %v165, 32
    %v170 = vadd.s32 %v165, 40
    %v171 = vadd.s32 %v165, 48
    %v172 = vadd.s32 %v165, 56
    %v173 = vadd.s32 %v165, 64
    %v174 = vadd.s32 %v165, 72
    %v175 = vadd.s32 %v165, 80
    %v176 = vadd.s32 %v165, 88
    %v177 = vadd.s32 %v165, 96
    %v178 = vadd.s32 %v165, 104
    %v179 = vadd.s32 %v165, 112
    %v180 = vadd.s32 %v165, 120
    %v181 = vadd.s32 %v165, 128
    %v182 = vadd.s32 %v165, 136
    %v183 = vadd.s32 %v165, 144
    %v184 = vadd.s32 %v165, 152
    %v185 = vadd.s32 %v165, 160
    %v186 = vadd.s32 %v165, 168
    %v187 = vadd.s32 %v165, 176
    %v188 = vadd.s32 %v165, 184
    %v189 = vadd.s32 %v165, 192
    %v190 = vadd.s32 %v165, 200
    %v191 = vadd.s32 %v165, 208
    %v192 = vadd.s32 %v165, 216
    %v193 = vadd.s32 %v165, 224
    %v194 = vadd.s32 %v165, 232
    %v195 = vadd.s32 %v165, 240
    %v196 = vadd.s32 %v165, 248
    %v197 = vadd.s32 %v165, 256
    %v198 = vadd.s32 %v165, 264
    %v199 = vadd.s32 %v165, 272
    %v200 = vadd.s32 %v165, 280
    %v201 = vadd.s32 %v165, 288
    %v202 = vadd.s32 %v165, 296
    %s203 = smul.u32 0, 300
    %v204 = vstv %s203
    %v205 = vadd.s32 %v165, %v204
    %v206 = vadd.s32 %v166, %v204
    %v207 = vadd.s32 %v167, %v204
    %v208 = vadd.s32 %v168, %v204
    %v209 = vadd.s32 %v169, %v204
    %v210 = vadd.s32 %v170, %v204
    %v211 = vadd.s32 %v171, %v204
    %v212 = vadd.s32 %v172, %v204
    %v213 = vadd.s32 %v173, %v204
    %v214 = vadd.s32 %v174, %v204
    %v215 = vadd.s32 %v175, %v204
    %v216 = vadd.s32 %v176, %v204
    %v217 = vadd.s32 %v177, %v204
    %v218 = vadd.s32 %v178, %v204
    %v219 = vadd.s32 %v179, %v204
    %v220 = vadd.s32 %v180, %v204
    %v221 = vadd.s32 %v181, %v204
    %v222 = vadd.s32 %v182, %v204
    %v223 = vadd.s32 %v183, %v204
    %v224 = vadd.s32 %v184, %v204
    %v225 = vadd.s32 %v185, %v204
    %v226 = vadd.s32 %v186, %v204
    %v227 = vadd.s32 %v187, %v204
    %v228 = vadd.s32 %v188, %v204
    %v229 = vadd.s32 %v189, %v204
    %v230 = vadd.s32 %v190, %v204
    %v231 = vadd.s32 %v191, %v204
    %v232 = vadd.s32 %v192, %v204
    %v233 = vadd.s32 %v193, %v204
    %v234 = vadd.s32 %v194, %v204
    %v235 = vadd.s32 %v195, %v204
    %v236 = vadd.s32 %v196, %v204
    %v237 = vadd.s32 %v197, %v204
    %v238 = vadd.s32 %v198, %v204
    %v239 = vadd.s32 %v199, %v204
    %v240 = vadd.s32 %v200, %v204
    %v241 = vadd.s32 %v201, %v204
    %v242 = vadd.s32 %v202, %v204
    %vm243 = vcmp.lt.s32.totalorder %v205, 300
    %vm244 = vcmp.lt.s32.totalorder %v206, 300
    %vm245 = vcmp.lt.s32.totalorder %v207, 300
    %vm246 = vcmp.lt.s32.totalorder %v208, 300
    %vm247 = vcmp.lt.s32.totalorder %v209, 300
    %vm248 = vcmp.lt.s32.totalorder %v210, 300
    %vm249 = vcmp.lt.s32.totalorder %v211, 300
    %vm250 = vcmp.lt.s32.totalorder %v212, 300
    %vm251 = vcmp.lt.s32.totalorder %v213, 300
    %vm252 = vcmp.lt.s32.totalorder %v214, 300
    %vm253 = vcmp.lt.s32.totalorder %v215, 300
    %vm254 = vcmp.lt.s32.totalorder %v216, 300
    %vm255 = vcmp.lt.s32.totalorder %v217, 300
    %vm256 = vcmp.lt.s32.totalorder %v218, 300
    %vm257 = vcmp.lt.s32.totalorder %v219, 300
    %vm258 = vcmp.lt.s32.totalorder %v220, 300
    %vm259 = vcmp.lt.s32.totalorder %v221, 300
    %vm260 = vcmp.lt.s32.totalorder %v222, 300
    %vm261 = vcmp.lt.s32.totalorder %v223, 300
    %vm262 = vcmp.lt.s32.totalorder %v224, 300
    %vm263 = vcmp.lt.s32.totalorder %v225, 300
    %vm264 = vcmp.lt.s32.totalorder %v226, 300
    %vm265 = vcmp.lt.s32.totalorder %v227, 300
    %vm266 = vcmp.lt.s32.totalorder %v228, 300
    %vm267 = vcmp.lt.s32.totalorder %v229, 300
    %vm268 = vcmp.lt.s32.totalorder %v230, 300
    %vm269 = vcmp.lt.s32.totalorder %v231, 300
    %vm270 = vcmp.lt.s32.totalorder %v232, 300
    %vm271 = vcmp.lt.s32.totalorder %v233, 300
    %vm272 = vcmp.lt.s32.totalorder %v234, 300
    %vm273 = vcmp.lt.s32.totalorder %v235, 300
    %vm274 = vcmp.lt.s32.totalorder %v236, 300
    %vm275 = vcmp.lt.s32.totalorder %v237, 300
    %vm276 = vcmp.lt.s32.totalorder %v238, 300
    %vm277 = vcmp.lt.s32.totalorder %v239, 300
    %vm278 = vcmp.lt.s32.totalorder %v240, 300
    %vm279 = vcmp.lt.s32.totalorder %v241, 300
    %vm280 = vcmp.lt.s32.totalorder %v242, 300
    %v281 = vsel %vm243, %v126, 0.0
    %v282 = vsel %vm244, %v127, 0.0
    %v283 = vsel %vm245, %v128, 0.0
    %v284 = vsel %vm246, %v129, 0.0
    %v285 = vsel %vm247, %v130, 0.0
    %v286 = vsel %vm248, %v131, 0.0
    %v287 = vsel %vm249, %v132, 0.0
    %v288 = vsel %vm250, %v133, 0.0
    %v289 = vsel %vm251, %v134, 0.0
    %v290 = vsel %vm252, %v135, 0.0
    %v291 = vsel %vm253, %v136, 0.0
    %v292 = vsel %vm254, %v137, 0.0
    %v293 = vsel %vm255, %v138, 0.0
    %v294 = vsel %vm256, %v139, 0.0
    %v295 = vsel %vm257, %v140, 0.0
    %v296 = vsel %vm258, %v141, 0.0
    %v297 = vsel %vm259, %v142, 0.0
    %v298 = vsel %vm260, %v143, 0.0
    %v299 = vsel %vm261, %v144, 0.0
    %v300 = vsel %vm262, %v145, 0.0
    %v301 = vsel %vm263, %v146, 0.0
    %v302 = vsel %vm264, %v147, 0.0
    %v303 = vsel %vm265, %v148, 0.0
    %v304 = vsel %vm266, %v149, 0.0
    %v305 = vsel %vm267, %v150, 0.0
    %v306 = vsel %vm268, %v151, 0.0
    %v307 = vsel %vm269, %v152, 0.0
    %v308 = vsel %vm270, %v153, 0.0
    %v309 = vsel %vm271, %v154, 0.0
    %v310 = vsel %vm272, %v155, 0.0
    %v311 = vsel %vm273, %v156, 0.0
    %v312 = vsel %vm274, %v157, 0.0
    %v313 = vsel %vm275, %v158, 0.0
    %v314 = vsel %vm276, %v159, 0.0
    %v315 = vsel %vm277, %v160, 0.0
    %v316 = vsel %vm278, %v161, 0.0
    %v317 = vsel %vm279, %v162, 0.0
    %v318 = vsel %vm280, %v163, 0.0
    %p319 = scmp.eq.s32.totalorder 0, 0
    // Predicated region
    $region10: #{tpu_custom_call.1} parent=1 // pred_check
      %p320 = pneg %p319
    $region11: #{tpu_custom_call.1} parent=1 // pred_check_branch
      %322 = sbr.rel (%p320) target = $region13
    $region12: #{tpu_custom_call.1} parent=1 // pred_region
      %vm323 = vcmask 0
      %324 = vst.msk [vmem:[#allocation2] sm:$0x1] %vm323, 0.0
    $region13: #{tpu_custom_call.1} parent=1 // pred_fallthru
      _
    %v325 = vld [vmem:[#allocation2] sm:$0x1]
    %vm326 = vcmask 23552
    %v327 = vsel %vm326, %v281, 0.0
    %v328 = vsel %vm326, %v282, 0.0
    %v329 = vadd.f32 %v327, %v328
    %v330 = vsel %vm326, %v283, 0.0
    %v331 = vadd.f32 %v329, %v330
    %v332 = vsel %vm326, %v284, 0.0
    %v333 = vadd.f32 %v331, %v332
    %v334 = vsel %vm326, %v285, 0.0
    %v335 = vadd.f32 %v333, %v334
    %v336 = vsel %vm326, %v286, 0.0
    %v337 = vadd.f32 %v335, %v336
    %v338 = vsel %vm326, %v287, 0.0
    %v339 = vadd.f32 %v337, %v338
    %v340 = vsel %vm326, %v288, 0.0
    %v341 = vadd.f32 %v339, %v340
    %v342 = vsel %vm326, %v289, 0.0
    %v343 = vadd.f32 %v341, %v342
    %v344 = vsel %vm326, %v290, 0.0
    %v345 = vadd.f32 %v343, %v344
    %v346 = vsel %vm326, %v291, 0.0
    %v347 = vadd.f32 %v345, %v346
    %v348 = vsel %vm326, %v292, 0.0
    %v349 = vadd.f32 %v347, %v348
    %v350 = vsel %vm326, %v293, 0.0
    %v351 = vadd.f32 %v349, %v350
    %v352 = vsel %vm326, %v294, 0.0
    %v353 = vadd.f32 %v351, %v352
    %v354 = vsel %vm326, %v295, 0.0
    %v355 = vadd.f32 %v353, %v354
    %v356 = vsel %vm326, %v296, 0.0
    %v357 = vadd.f32 %v355, %v356
    %v358 = vsel %vm326, %v297, 0.0
    %v359 = vadd.f32 %v357, %v358
    %v360 = vsel %vm326, %v298, 0.0
    %v361 = vadd.f32 %v359, %v360
    %v362 = vsel %vm326, %v299, 0.0
    %v363 = vadd.f32 %v361, %v362
    %v364 = vsel %vm326, %v300, 0.0
    %v365 = vadd.f32 %v363, %v364
    %v366 = vsel %vm326, %v301, 0.0
    %v367 = vadd.f32 %v365, %v366
    %v368 = vsel %vm326, %v302, 0.0
    %v369 = vadd.f32 %v367, %v368
    %v370 = vsel %vm326, %v303, 0.0
    %v371 = vadd.f32 %v369, %v370
    %v372 = vsel %vm326, %v304, 0.0
    %v373 = vadd.f32 %v371, %v372
    %v374 = vsel %vm326, %v305, 0.0
    %v375 = vadd.f32 %v373, %v374
    %v376 = vsel %vm326, %v306, 0.0
    %v377 = vadd.f32 %v375, %v376
    %v378 = vsel %vm326, %v307, 0.0
    %v379 = vadd.f32 %v377, %v378
    %v380 = vsel %vm326, %v308, 0.0
    %v381 = vadd.f32 %v379, %v380
    %v382 = vsel %vm326, %v309, 0.0
    %v383 = vadd.f32 %v381, %v382
    %v384 = vsel %vm326, %v310, 0.0
    %v385 = vadd.f32 %v383, %v384
    %v386 = vsel %vm326, %v311, 0.0
    %v387 = vadd.f32 %v385, %v386
    %v388 = vsel %vm326, %v312, 0.0
    %v389 = vadd.f32 %v387, %v388
    %v390 = vsel %vm326, %v313, 0.0
    %v391 = vadd.f32 %v389, %v390
    %v392 = vsel %vm326, %v314, 0.0
    %v393 = vadd.f32 %v391, %v392
    %v394 = vsel %vm326, %v315, 0.0
    %v395 = vadd.f32 %v393, %v394
    %v396 = vsel %vm326, %v316, 0.0
    %v397 = vadd.f32 %v395, %v396
    %v398 = vsel %vm326, %v317, 0.0
    %v399 = vadd.f32 %v397, %v398
    %vm400 = vcmask 19456
    %v401 = vsel %vm400, %v318, 0.0
    %v402 = vadd.f32 %v399, %v401
    %403 = vadd.xlane.f32.xlu0 %v402
    %v404 = vpop.xlane.xlu0 %403
    %v405 = vrot.slane %v404, 4
    %v406 = vadd.f32 %v404, %v405
    %v407 = vrot.slane %v406, 2
    %v408 = vadd.f32 %v406, %v407
    %v409 = vrot.slane %v408, 1
    %v410 = vadd.f32 %v408, %v409
    %s411 = vtos %v410
    %v412 = vstv %s411
    %v413 = vadd.f32 %v325, %v412
    %vm414 = vcmask 0
    %415 = vst.msk [vmem:[#allocation2] sm:$0x1] %vm414, %v413
    // Predicated region
    $region14: #{tpu_custom_call.1} parent=1 // pred_check
      _
    $region15: #{tpu_custom_call.1} parent=1 // pred_check_branch
      %417 = sbr.rel (0) target = $region17
    $region16: #{tpu_custom_call.1} parent=1 // pred_region
      %s419 = ssub.s32 16, 16
      %420 = vsyncadd [#allocation3], %s419
      %s422 = sshll.u32 [#allocation2], 4
      %s423 = int_to_ptr.vmem [resolvable:$true] %s422
      %425 = dma.vmem_to_hbm [thread:$0]  %s423, 16, %s2, [#allocation3]
    $region17: #{tpu_custom_call.1} parent=1 // pred_fallthru
      _
    // Predicated region
    $region18: #{tpu_custom_call.1} parent=1 // pred_check
      _
    $region19: #{tpu_custom_call.1} parent=1 // pred_check_branch
      %427 = sbr.rel (0) target = $region21
    $region20: #{tpu_custom_call.1} parent=1 // pred_region
      %428 = dma.done [#allocation3], 16
    $region21: #{tpu_custom_call.1} parent=1 // pred_fallthru
      _
    %429 = vsyncpa [#allocation3], 1

</llo_original>
